<compile_context>
chip_gen: v6e
topology: v6e:2x2x1
jax: 0.10.0
libtpu: 0.0.40
codegen_flags: <defaults>
</compile_context>

<pallas_src>
import jax
import jax.numpy as jnp
from jax.experimental import pallas as pl
from jax.experimental.pallas import tpu as pltpu


def _round_up(x: int, m: int) -> int:
    return ((x + m - 1) // m) * m


def _qfunction_kernel(obs_ref, act_ref,
                      w1o_ref, w1a_ref, b1_ref,
                      w2_ref, b2_ref,
                      w3_ref, b3_ref,
                      out_ref):
    dot_dtype = w2_ref.dtype

    # Layer 1: split-W1 formulation == Linear(concat([obs, action])).
    # obs/action are read unpadded from HBM and cast to the dot dtype on the VPU.
    h1 = (jnp.dot(obs_ref[...].astype(dot_dtype), w1o_ref[...],
                  preferred_element_type=jnp.float32)
          + jnp.dot(act_ref[...].astype(dot_dtype), w1a_ref[...],
                    preferred_element_type=jnp.float32)
          + b1_ref[...])                                   # bias-add in f32
    h1 = jnp.maximum(h1, 0.0)                              # ReLU in f32

    # Layer 2.
    h2 = (jnp.dot(h1.astype(dot_dtype), w2_ref[...],
                  preferred_element_type=jnp.float32)
          + b2_ref[...])
    h2 = jnp.maximum(h2, 0.0)

    # Output head: MXU-shaped (TILE_B, 128) dot; only column 0 is real.
    q = (jnp.dot(h2.astype(dot_dtype), w3_ref[...],
                 preferred_element_type=jnp.float32)
         + b3_ref[0, 0])                                   # scalar bias from SMEM
    out_ref[...] = q[:, :1]                                # (TILE_B, 1) f32 store


def prepare_params(params, obs_dim, *, dot_dtype=jnp.bfloat16):
    """One-time weight preprocessing. Call once; reuse across forward calls.

    params = (w1, b1, w2, b2, w3, b3) with w_i stored as (in, out) and
    b_i as (1, out)  (i.e. torch nn.Linear weights transposed).
    """
    w1, b1, w2, b2, w3, b3 = params
    in_dim, hidden = w1.shape
    act_dim = in_dim - obs_dim
    H = _round_up(hidden, 128)   # lane-pad hidden (zero rows/cols => inert math)
    OUT = 128                    # lane-pad the 1-wide head; only column 0 is real

    def pad2(a, rows, cols, dtype):
        a = a.astype(dtype)
        return jnp.pad(a, ((0, rows - a.shape[0]), (0, cols - a.shape[1])))

    return dict(
        w1_obs=pad2(w1[:obs_dim], obs_dim, H, dot_dtype),
        w1_act=pad2(w1[obs_dim:], act_dim, H, dot_dtype),
        b1=pad2(b1, 1, H, jnp.float32),
        w2=pad2(w2, H, H, dot_dtype),
        b2=pad2(b2, 1, H, jnp.float32),
        w3=pad2(w3, H, OUT, dot_dtype),
        b3=b3.reshape(1, 1).astype(jnp.float32),
    )


def qfunction_forward(obs, action, prepared, *, tile_b=512, num_cores=1,
                      single_buffer_weights=False):
    """Pallas QFunction forward. obs: (B, obs_dim) f32, action: (B, act_dim) f32."""
    assert obs.shape[0] == action.shape[0]
    B, obs_dim = obs.shape
    _, act_dim = action.shape

    w1o, w1a = prepared["w1_obs"], prepared["w1_act"]
    b1, w2, b2 = prepared["b1"], prepared["w2"], prepared["b2"]
    w3, b3 = prepared["w3"], prepared["b3"]
    assert w1o.shape[0] == obs_dim and w1a.shape[0] == act_dim
    H, OUT = w2.shape[0], w3.shape[1]

    dot_itemsize = jnp.dtype(w2.dtype).itemsize
    row_mult = 16 if dot_itemsize < 4 else 8      # packed-sublane friendly rows

    TILE_B = max(8, min(_round_up(tile_b, row_mult), _round_up(B, 8)))
    if num_cores > 1:
        # v7x: keep >= num_cores grid steps so the "parallel" batch axis can be
        # sharded across both TensorCores.
        TILE_B = min(TILE_B, _round_up(pl.cdiv(B, num_cores), 8))
    grid = (pl.cdiv(B, TILE_B),)                  # masked tail; no batch padding

    # Resident weights: constant index map; optionally single-buffered (v7x VMEM).
    def w_spec(shape):
        if single_buffer_weights:
            return pl.BlockSpec(shape, lambda i: (0, 0),
                                pipeline_mode=pl.Buffered(1))
        return pl.BlockSpec(shape, lambda i: (0, 0))

    in_specs = [
        pl.BlockSpec((TILE_B, obs_dim), lambda i: (i, 0)),   # unpadded activation reads
        pl.BlockSpec((TILE_B, act_dim), lambda i: (i, 0)),
        w_spec((obs_dim, H)),
        w_spec((act_dim, H)),
        w_spec((1, H)),
        w_spec((H, H)),
        w_spec((1, H)),
        w_spec((H, OUT)),
        pl.BlockSpec((1, 1), lambda i: (0, 0),
                     memory_space=pltpu.MemorySpace.SMEM),
    ]
    out_spec = pl.BlockSpec((TILE_B, 1), lambda i: (i, 0))   # 4 B/row writeback

    flops = 2 * B * ((obs_dim + act_dim) * H + H * H + H * OUT)
    bytes_accessed = int(
        obs.size * obs.dtype.itemsize + action.size * action.dtype.itemsize
        + B * 4                                                  # (B, 1) output
        + (w1o.size + w1a.size + w2.size + w3.size) * dot_itemsize
        + (b1.size + b2.size + 1) * 4)
    cost = pl.CostEstimate(flops=flops, transcendentals=0,
                           bytes_accessed=bytes_accessed)

    return pl.pallas_call(
        _qfunction_kernel,
        out_shape=jax.ShapeDtypeStruct((B, 1), jnp.float32),
        grid=grid,
        in_specs=in_specs,
        out_specs=out_spec,
        compiler_params=pltpu.CompilerParams(
            dimension_semantics=("parallel",)),
        cost_estimate=cost,
    )(obs, action, w1o, w1a, b1, w2, b2, w3, b3)


def init_qfunction_params(key, obs_dim, action_dim, hidden_dim):
    """Deterministic synthetic init mirroring the nn.Linear shapes.

    nn.Linear(i, o) has weight (o, i), bias (o,). We store weights transposed
    as (i, o) and biases as (1, o).
    """
    in_dim = obs_dim + action_dim
    ks = jax.random.split(key, 6)

    def lin(kw, kb, i, o):
        bound = 1.0 / jnp.sqrt(jnp.asarray(i, jnp.float32))
        w = jax.random.uniform(kw, (i, o), jnp.float32, -bound, bound)  # == torch (o,i).T
        b = jax.random.uniform(kb, (1, o), jnp.float32, -bound, bound)
        return w, b

    w1, b1 = lin(ks[0], ks[1], in_dim, hidden_dim)
    w2, b2 = lin(ks[2], ks[3], hidden_dim, hidden_dim)
    w3, b3 = lin(ks[4], ks[5], hidden_dim, 1)
    return (w1, b1, w2, b2, w3, b3)


def _reference_forward(obs, action, params):
    w1, b1, w2, b2, w3, b3 = params
    x = jnp.concatenate([obs, action], axis=1)
    h1 = jnp.maximum(x @ w1 + b1, 0.0)
    h2 = jnp.maximum(h1 @ w2 + b2, 0.0)
    return h2 @ w3 + b3


if __name__ == "__main__":
    key = jax.random.PRNGKey(0)
    k_obs, k_act, k_par, k_obs2, k_act2 = jax.random.split(key, 5)

    B, OBS_DIM, ACT_DIM, HIDDEN = 8, 24, 8, 32

    obs = jax.random.normal(k_obs, (B, OBS_DIM), jnp.float32)
    action = jax.random.normal(k_act, (B, ACT_DIM), jnp.float32)
    params = init_qfunction_params(k_par, OBS_DIM, ACT_DIM, HIDDEN)
    q_ref = _reference_forward(obs, action, params)

    # One-time weight preprocessing (f32 dots for an exact check, bf16 default path).
    prep_f32 = prepare_params(params, OBS_DIM, dot_dtype=jnp.float32)
    prep_bf16 = prepare_params(params, OBS_DIM)          # bf16 dots (default)

    # f32 dot path: exact match with the reference.
    q = jax.block_until_ready(qfunction_forward(obs, action, prep_f32))
    assert q.shape == (B, 1)
    assert jnp.allclose(q, q_ref, atol=1e-4, rtol=1e-4)

    # bf16 dot path (MXU fast path), f32 accumulation — loose check.
    q_bf16 = jax.block_until_ready(qfunction_forward(obs, action, prep_bf16))
    assert jnp.allclose(q_bf16, q_ref, atol=5e-2, rtol=5e-2)

    # Larger, non-multiple batch: exercises the cdiv grid with a masked tail block.
    B2 = 300
    obs2 = jax.random.normal(k_obs2, (B2, OBS_DIM), jnp.float32)
    action2 = jax.random.normal(k_act2, (B2, ACT_DIM), jnp.float32)
    q2_ref = _reference_forward(obs2, action2, params)

    q2 = jax.block_until_ready(
        qfunction_forward(obs2, action2, prep_f32, tile_b=128))
    assert q2.shape == (B2, 1)
    assert jnp.allclose(q2, q2_ref, atol=1e-4, rtol=1e-4)

    # Same batch, default tile_b with num_cores=2 (v7x-style >=2 grid steps), bf16.
    q2_mc = jax.block_until_ready(
        qfunction_forward(obs2, action2, prep_bf16, num_cores=2))
    assert jnp.allclose(q2_mc, q2_ref, atol=5e-2, rtol=5e-2)

    print("KERNEL_OK")
</pallas_src>

<mosaic_0001>
module attributes {stable_mosaic.version = 11 : i64} {
  func.func @_qfunction_kernel(%arg0: i32, %arg1: memref<8x24xf32, #tpu.memory_space<vmem>>, %arg2: memref<8x8xf32, #tpu.memory_space<vmem>>, %arg3: memref<24x128xf32, #tpu.memory_space<vmem>>, %arg4: memref<8x128xf32, #tpu.memory_space<vmem>>, %arg5: memref<1x128xf32, #tpu.memory_space<vmem>>, %arg6: memref<128x128xf32, #tpu.memory_space<vmem>>, %arg7: memref<1x128xf32, #tpu.memory_space<vmem>>, %arg8: memref<128x128xf32, #tpu.memory_space<vmem>>, %arg9: memref<1x1xf32, #tpu.memory_space<smem>>, %arg10: memref<8x1xf32, #tpu.memory_space<vmem>>) attributes {dimension_semantics = [#tpu.dimension_semantics<parallel>], iteration_bounds = array<i64: 1>, scalar_prefetch = 0 : i64, scratch_operands = 0 : i64, tpu.core_type = #tpu.core_type<tc>, window_params = [{transform_indices = @transform_0, window_bounds = array<i64: 8, 24>}, {transform_indices = @transform_1, window_bounds = array<i64: 8, 8>}, {pipeline_mode = #tpu.pipeline_mode<synchronous>, transform_indices = @transform_2, window_bounds = array<i64: 24, 128>}, {pipeline_mode = #tpu.pipeline_mode<synchronous>, transform_indices = @transform_3, window_bounds = array<i64: 8, 128>}, {pipeline_mode = #tpu.pipeline_mode<synchronous>, transform_indices = @transform_4, window_bounds = array<i64: 1, 128>}, {pipeline_mode = #tpu.pipeline_mode<synchronous>, transform_indices = @transform_5, window_bounds = array<i64: 128, 128>}, {pipeline_mode = #tpu.pipeline_mode<synchronous>, transform_indices = @transform_6, window_bounds = array<i64: 1, 128>}, {pipeline_mode = #tpu.pipeline_mode<synchronous>, transform_indices = @transform_7, window_bounds = array<i64: 128, 128>}, {transform_indices = @transform_8, window_bounds = array<i64: 1, 1>}, {transform_indices = @transform_9, window_bounds = array<i64: 8, 1>}]} {
    %c0 = arith.constant 0 : index
    %c0_0 = arith.constant 0 : index
    %0 = vector.load %arg1[%c0, %c0_0] : memref<8x24xf32, #tpu.memory_space<vmem>>, vector<8x24xf32>
    %c0_1 = arith.constant 0 : index
    %c0_2 = arith.constant 0 : index
    %1 = vector.load %arg3[%c0_1, %c0_2] : memref<24x128xf32, #tpu.memory_space<vmem>>, vector<24x128xf32>
    %cst = arith.constant dense<0.000000e+00> : vector<8x128xf32>
    %2 = tpu.matmul %0, %1, %cst {dimension_numbers = #tpu.dot_dimension_numbers<[1], [0], [0], [1], [0, 0, 1, 1], [], []>} : vector<8x24xf32>, vector<24x128xf32>, vector<8x128xf32> -> vector<8x128xf32>
    %c0_3 = arith.constant 0 : index
    %c0_4 = arith.constant 0 : index
    %3 = vector.load %arg2[%c0_3, %c0_4] : memref<8x8xf32, #tpu.memory_space<vmem>>, vector<8x8xf32>
    %c0_5 = arith.constant 0 : index
    %c0_6 = arith.constant 0 : index
    %4 = vector.load %arg4[%c0_5, %c0_6] : memref<8x128xf32, #tpu.memory_space<vmem>>, vector<8x128xf32>
    %cst_7 = arith.constant dense<0.000000e+00> : vector<8x128xf32>
    %5 = tpu.matmul %3, %4, %cst_7 {dimension_numbers = #tpu.dot_dimension_numbers<[1], [0], [0], [1], [0, 0, 1, 1], [], []>} : vector<8x8xf32>, vector<8x128xf32>, vector<8x128xf32> -> vector<8x128xf32>
    %6 = arith.addf %2, %5 : vector<8x128xf32>
    %c0_8 = arith.constant 0 : index
    %c0_9 = arith.constant 0 : index
    %7 = vector.load %arg5[%c0_8, %c0_9] : memref<1x128xf32, #tpu.memory_space<vmem>>, vector<1x128xf32>
    %8 = vector.broadcast %7 : vector<1x128xf32> to vector<8x128xf32>
    %9 = arith.addf %6, %8 : vector<8x128xf32>
    %cst_10 = arith.constant 0.000000e+00 : f32
    %10 = vector.broadcast %cst_10 : f32 to vector<8x128xf32>
    %11 = arith.maximumf %9, %10 : vector<8x128xf32>
    %c0_11 = arith.constant 0 : index
    %c0_12 = arith.constant 0 : index
    %12 = vector.load %arg6[%c0_11, %c0_12] : memref<128x128xf32, #tpu.memory_space<vmem>>, vector<128x128xf32>
    %cst_13 = arith.constant dense<0.000000e+00> : vector<8x128xf32>
    %13 = tpu.matmul %11, %12, %cst_13 {dimension_numbers = #tpu.dot_dimension_numbers<[1], [0], [0], [1], [0, 0, 1, 1], [], []>} : vector<8x128xf32>, vector<128x128xf32>, vector<8x128xf32> -> vector<8x128xf32>
    %c0_14 = arith.constant 0 : index
    %c0_15 = arith.constant 0 : index
    %14 = vector.load %arg7[%c0_14, %c0_15] : memref<1x128xf32, #tpu.memory_space<vmem>>, vector<1x128xf32>
    %15 = vector.broadcast %14 : vector<1x128xf32> to vector<8x128xf32>
    %16 = arith.addf %13, %15 : vector<8x128xf32>
    %cst_16 = arith.constant 0.000000e+00 : f32
    %17 = vector.broadcast %cst_16 : f32 to vector<8x128xf32>
    %18 = arith.maximumf %16, %17 : vector<8x128xf32>
    %c0_17 = arith.constant 0 : index
    %c0_18 = arith.constant 0 : index
    %19 = vector.load %arg8[%c0_17, %c0_18] : memref<128x128xf32, #tpu.memory_space<vmem>>, vector<128x128xf32>
    %cst_19 = arith.constant dense<0.000000e+00> : vector<8x128xf32>
    %20 = tpu.matmul %18, %19, %cst_19 {dimension_numbers = #tpu.dot_dimension_numbers<[1], [0], [0], [1], [0, 0, 1, 1], [], []>} : vector<8x128xf32>, vector<128x128xf32>, vector<8x128xf32> -> vector<8x128xf32>
    %c0_20 = arith.constant 0 : index
    %c0_21 = arith.constant 0 : index
    %21 = memref.load %arg9[%c0_20, %c0_21] : memref<1x1xf32, #tpu.memory_space<smem>>
    %22 = vector.broadcast %21 : f32 to vector<8x128xf32>
    %23 = arith.addf %20, %22 : vector<8x128xf32>
    %24 = vector.extract_strided_slice %23 {offsets = [0, 0], sizes = [8, 1], strides = [1, 1]} : vector<8x128xf32> to vector<8x1xf32>
    %c0_22 = arith.constant 0 : index
    %c0_23 = arith.constant 0 : index
    %25 = vector.load %arg10[%c0_22, %c0_23] : memref<8x1xf32, #tpu.memory_space<vmem>>, vector<8x1xf32>
    tpu.vector_store %arg10[%c0_22, %c0_23], %24 {strides = array<i32>} : memref<8x1xf32, #tpu.memory_space<vmem>>, vector<8x1xf32>,
    return
  }
  func.func @transform_0(%arg0: i32) -> (i32, i32) {
    %c0_i32 = arith.constant 0 : i32
    %c0_i32_0 = arith.constant 0 : i32
    return %arg0, %c0_i32 : i32, i32
  }
  func.func @transform_1(%arg0: i32) -> (i32, i32) {
    %c0_i32 = arith.constant 0 : i32
    %c0_i32_0 = arith.constant 0 : i32
    return %arg0, %c0_i32 : i32, i32
  }
  func.func @transform_2(%arg0: i32) -> (i32, i32) {
    %c0_i32 = arith.constant 0 : i32
    %c0_i32_0 = arith.constant 0 : i32
    %c0_i32_1 = arith.constant 0 : i32
    return %c0_i32, %c0_i32_0 : i32, i32
  }
  func.func @transform_3(%arg0: i32) -> (i32, i32) {
    %c0_i32 = arith.constant 0 : i32
    %c0_i32_0 = arith.constant 0 : i32
    %c0_i32_1 = arith.constant 0 : i32
    return %c0_i32, %c0_i32_0 : i32, i32
  }
  func.func @transform_4(%arg0: i32) -> (i32, i32) {
    %c0_i32 = arith.constant 0 : i32
    %c0_i32_0 = arith.constant 0 : i32
    %c0_i32_1 = arith.constant 0 : i32
    return %c0_i32, %c0_i32_0 : i32, i32
  }
  func.func @transform_5(%arg0: i32) -> (i32, i32) {
    %c0_i32 = arith.constant 0 : i32
    %c0_i32_0 = arith.constant 0 : i32
    %c0_i32_1 = arith.constant 0 : i32
    return %c0_i32, %c0_i32_0 : i32, i32
  }
  func.func @transform_6(%arg0: i32) -> (i32, i32) {
    %c0_i32 = arith.constant 0 : i32
    %c0_i32_0 = arith.constant 0 : i32
    %c0_i32_1 = arith.constant 0 : i32
    return %c0_i32, %c0_i32_0 : i32, i32
  }
  func.func @transform_7(%arg0: i32) -> (i32, i32) {
    %c0_i32 = arith.constant 0 : i32
    %c0_i32_0 = arith.constant 0 : i32
    %c0_i32_1 = arith.constant 0 : i32
    return %c0_i32, %c0_i32_0 : i32, i32
  }
  func.func @transform_8(%arg0: i32) -> (i32, i32) {
    %c0_i32 = arith.constant 0 : i32
    %c0_i32_0 = arith.constant 0 : i32
    %c0_i32_1 = arith.constant 0 : i32
    return %c0_i32, %c0_i32_0 : i32, i32
  }
  func.func @transform_9(%arg0: i32) -> (i32, i32) {
    %c0_i32 = arith.constant 0 : i32
    %c0_i32_0 = arith.constant 0 : i32
    return %arg0, %c0_i32 : i32, i32
  }
}

</mosaic_0001>

<llo_original>
// kernel: tpu_custom_call.1
$region0: #{tpu_custom_call.1}
  #allocation0 [shape = 'u32[]', space=smem, size = 0x4, offset = 0x4, fixed_abs, tag = 'smem constant byte address 0x4 - core index']
  #allocation1 [shape = 'u32[144,128]{1,0:T(1,128)}', space=vmem, size = 0x12000, scoped, tag = 'internal scratch']
  #allocation2 [shape = 'f32[1,1]{1,0:T(1,128)S(6)}', space=smem, size = 0x200, scoped, tag = 'scoped memory for tpu_custom_call.1']
  %s0 = inlined_call_operand.hbm [shape: f32[8,24], index: 0, kind: input, shape index: {}]
  %s1 = inlined_call_operand.hbm [shape: f32[8,8], index: 1, kind: input, shape index: {}]
  %s2 = inlined_call_operand.hbm [shape: f32[24,128], index: 2, kind: input, shape index: {}]
  %s3 = inlined_call_operand.hbm [shape: f32[8,128], index: 3, kind: input, shape index: {}]
  %s4 = inlined_call_operand.vmem [shape: f32[1,128], index: 4, kind: input, shape index: {}]
  %s5 = inlined_call_operand.hbm [shape: f32[128,128], index: 5, kind: input, shape index: {}]
  %s6 = inlined_call_operand.vmem [shape: f32[1,128], index: 6, kind: input, shape index: {}]
  %s7 = inlined_call_operand.hbm [shape: f32[128,128], index: 7, kind: input, shape index: {}]
  %s8 = inlined_call_operand.<no memory space> [shape: f32[1,1], index: 8, kind: input, shape index: {}]
  %s9 = inlined_call_operand.vmem [shape: f32[8,1], index: 9, kind: output, shape index: {}]
  %s10 = sld [smem:[#allocation0]]
  $region70: #{tpu_custom_call.1} parent=0
    _
  %s12 = ssub.s32 1, %s10
  %s13 = scalar_select 0, %s12, %s10
  %14 = sst [smem:[#allocation2]] %s8
  $region1: #{tpu_custom_call.1} parent=0
    #allocation3 [shape = 'u8[4096]{0}', space=vmem, size = 0x1000, scoped, tag = 'input window, operand 0, single buffered']
    #allocation4 [shape = 's32[1]{0}', space=sflag, size = 0x4, scoped, tag = 'scoped memory for tpu_custom_call.1']
    #allocation5 [shape = 'u8[4096]{0}', space=vmem, size = 0x1000, scoped, tag = 'input window, operand 1, single buffered']
    #allocation6 [shape = 's32[1]{0}', space=sflag, size = 0x4, scoped, tag = 'scoped memory for tpu_custom_call.1']
    #allocation7 [shape = 'u8[12288]{0}', space=vmem, size = 0x3000, scoped, tag = 'input window, operand 2, single buffered']
    #allocation8 [shape = 'u8[4096]{0}', space=vmem, size = 0x1000, scoped, tag = 'input window, operand 3, single buffered']
    #allocation9 [shape = 's32[1]{0}', space=sflag, size = 0x4, scoped, tag = 'scoped memory for tpu_custom_call.1']
    #allocation10 [shape = 'u8[65536]{0}', space=vmem, size = 0x10000, scoped, tag = 'input window, operand 5, single buffered']
    #allocation11 [shape = 'u8[65536]{0}', space=vmem, size = 0x10000, scoped, tag = 'input window, operand 7, single buffered']
    #allocation12 [shape = 's32[1]{0}', space=sflag, size = 0x4, scoped, tag = 'scoped memory for tpu_custom_call.1']
    %15 = vsyncpa [#allocation4], 0
    %16 = vsyncpa [#allocation6], 0
    %17 = vsyncpa [#allocation9], 0
    %18 = vsyncpa [#allocation12], 0
    // Predicated region
    $region2: #{tpu_custom_call.1} parent=1 // pred_check
      _
    $region3: #{tpu_custom_call.1} parent=1 // pred_check_branch
      %20 = sbr.rel (0) target = $region5
    $region4: #{tpu_custom_call.1} parent=1 // pred_region
      %s22 = ssub.s32 128, 128
      %23 = vsyncadd [#allocation4], %s22
      %s25 = sshll.u32 [#allocation3], 4
      %s26 = int_to_ptr.vmem [resolvable:$true] %s25
      %28 = dma.hbm_to_vmem [thread:$0]  %s0, 128, %s26, [#allocation4]
    $region5: #{tpu_custom_call.1} parent=1 // pred_fallthru
      _
    // Predicated region
    $region6: #{tpu_custom_call.1} parent=1 // pred_check
      _
    $region7: #{tpu_custom_call.1} parent=1 // pred_check_branch
      %30 = sbr.rel (0) target = $region9
    $region8: #{tpu_custom_call.1} parent=1 // pred_region
      %s32 = ssub.s32 128, 128
      %33 = vsyncadd [#allocation6], %s32
      %s35 = sshll.u32 [#allocation5], 4
      %s36 = int_to_ptr.vmem [resolvable:$true] %s35
      %38 = dma.hbm_to_vmem [thread:$0]  %s1, 128, %s36, [#allocation6]
    $region9: #{tpu_custom_call.1} parent=1 // pred_fallthru
      _
    // Predicated region
    $region10: #{tpu_custom_call.1} parent=1 // pred_check
      _
    $region11: #{tpu_custom_call.1} parent=1 // pred_check_branch
      %40 = sbr.rel (0) target = $region13
    $region12: #{tpu_custom_call.1} parent=1 // pred_region
      %s42 = ssub.s32 384, 384
      %43 = vsyncadd [#allocation6], %s42
      %s44 = sshll.u32 [#allocation7], 4
      %s45 = int_to_ptr.vmem [resolvable:$true] %s44
      %50 = dma.hbm_to_vmem [thread:$0]  %s2, 384, %s45, [#allocation6], 128, 128, 8
    $region13: #{tpu_custom_call.1} parent=1 // pred_fallthru
      _
    // Predicated region
    $region14: #{tpu_custom_call.1} parent=1 // pred_check
      _
    $region15: #{tpu_custom_call.1} parent=1 // pred_check_branch
      %52 = sbr.rel (0) target = $region17
    $region16: #{tpu_custom_call.1} parent=1 // pred_region
      %s54 = ssub.s32 128, 128
      %55 = vsyncadd [#allocation9], %s54
      %s57 = sshll.u32 [#allocation8], 4
      %s58 = int_to_ptr.vmem [resolvable:$true] %s57
      %60 = dma.hbm_to_vmem [thread:$0]  %s3, 128, %s58, [#allocation9]
    $region17: #{tpu_custom_call.1} parent=1 // pred_fallthru
      _
    // Predicated region
    $region18: #{tpu_custom_call.1} parent=1 // pred_check
      _
    $region19: #{tpu_custom_call.1} parent=1 // pred_check_branch
      %62 = sbr.rel (0) target = $region21
    $region20: #{tpu_custom_call.1} parent=1 // pred_region
      _
    $region21: #{tpu_custom_call.1} parent=1 // pred_fallthru
      _
    // Predicated region
    $region22: #{tpu_custom_call.1} parent=1 // pred_check
      _
    $region23: #{tpu_custom_call.1} parent=1 // pred_check_branch
      %64 = sbr.rel (0) target = $region25
    $region24: #{tpu_custom_call.1} parent=1 // pred_region
      %s66 = ssub.s32 2048, 2048
      %67 = vsyncadd [#allocation9], %s66
      %s68 = sshll.u32 [#allocation10], 4
      %s69 = int_to_ptr.vmem [resolvable:$true] %s68
      %74 = dma.hbm_to_vmem [thread:$0]  %s5, 2048, %s69, [#allocation9], 128, 128, 8
    $region25: #{tpu_custom_call.1} parent=1 // pred_fallthru
      _
    // Predicated region
    $region26: #{tpu_custom_call.1} parent=1 // pred_check
      _
    $region27: #{tpu_custom_call.1} parent=1 // pred_check_branch
      %76 = sbr.rel (0) target = $region29
    $region28: #{tpu_custom_call.1} parent=1 // pred_region
      _
    $region29: #{tpu_custom_call.1} parent=1 // pred_fallthru
      _
    // Predicated region
    $region30: #{tpu_custom_call.1} parent=1 // pred_check
      _
    $region31: #{tpu_custom_call.1} parent=1 // pred_check_branch
      %78 = sbr.rel (0) target = $region33
    $region32: #{tpu_custom_call.1} parent=1 // pred_region
      %s80 = ssub.s32 2048, 2048
      %81 = vsyncadd [#allocation12], %s80
      %s82 = sshll.u32 [#allocation11], 4
      %s83 = int_to_ptr.vmem [resolvable:$true] %s82
      %88 = dma.hbm_to_vmem [thread:$0]  %s7, 2048, %s83, [#allocation12], 128, 128, 8
    $region33: #{tpu_custom_call.1} parent=1 // pred_fallthru
      _
    // Predicated region
    $region34: #{tpu_custom_call.1} parent=1 // pred_check
      _
    $region35: #{tpu_custom_call.1} parent=1 // pred_check_branch
      %90 = sbr.rel (0) target = $region37
    $region36: #{tpu_custom_call.1} parent=1 // pred_region
      _
    $region37: #{tpu_custom_call.1} parent=1 // pred_fallthru
      _
    // Predicated region
    $region38: #{tpu_custom_call.1} parent=1 // pred_check
      _
    $region39: #{tpu_custom_call.1} parent=1 // pred_check_branch
      %92 = sbr.rel (0) target = $region41
    $region40: #{tpu_custom_call.1} parent=1 // pred_region
      %93 = dma.done [#allocation4], 128
    $region41: #{tpu_custom_call.1} parent=1 // pred_fallthru
      _
    // Predicated region
    $region42: #{tpu_custom_call.1} parent=1 // pred_check
      _
    $region43: #{tpu_custom_call.1} parent=1 // pred_check_branch
      %95 = sbr.rel (0) target = $region45
    $region44: #{tpu_custom_call.1} parent=1 // pred_region
      %96 = dma.done [#allocation6], 128
    $region45: #{tpu_custom_call.1} parent=1 // pred_fallthru
      _
    // Predicated region
    $region46: #{tpu_custom_call.1} parent=1 // pred_check
      _
    $region47: #{tpu_custom_call.1} parent=1 // pred_check_branch
      %98 = sbr.rel (0) target = $region49
    $region48: #{tpu_custom_call.1} parent=1 // pred_region
      %99 = dma.done [#allocation6], 384
    $region49: #{tpu_custom_call.1} parent=1 // pred_fallthru
      _
    // Predicated region
    $region50: #{tpu_custom_call.1} parent=1 // pred_check
      _
    $region51: #{tpu_custom_call.1} parent=1 // pred_check_branch
      %101 = sbr.rel (0) target = $region53
    $region52: #{tpu_custom_call.1} parent=1 // pred_region
      %102 = dma.done [#allocation9], 128
    $region53: #{tpu_custom_call.1} parent=1 // pred_fallthru
      _
    // Predicated region
    $region54: #{tpu_custom_call.1} parent=1 // pred_check
      _
    $region55: #{tpu_custom_call.1} parent=1 // pred_check_branch
      %104 = sbr.rel (0) target = $region57
    $region56: #{tpu_custom_call.1} parent=1 // pred_region
      %105 = dma.done [#allocation9], 2048
    $region57: #{tpu_custom_call.1} parent=1 // pred_fallthru
      _
    // Predicated region
    $region58: #{tpu_custom_call.1} parent=1 // pred_check
      _
    $region59: #{tpu_custom_call.1} parent=1 // pred_check_branch
      %107 = sbr.rel (0) target = $region61
    $region60: #{tpu_custom_call.1} parent=1 // pred_region
      %108 = dma.done [#allocation12], 2048
    $region61: #{tpu_custom_call.1} parent=1 // pred_fallthru
      _
    %v109 = vld [vmem:[#allocation3] sm:$0xff]
    %v110 = vld [vmem:[#allocation7] sm:$0xff]
    %v111 = vld [vmem:[#allocation7 + $0x8] sm:$0xff]
    %v112 = vld [vmem:[#allocation7 + $0x10] sm:$0xff]
    %v113 = vld [vmem:[#allocation5] sm:$0xff]
    %v114 = vld [vmem:[#allocation8] sm:$0xff]
    %vm115 = vcmask 64512
    %v117 = vsel %vm115, %v113, 0
    %119 = vmatprep.subr.mxu0 0.0
    %120 = vmatpush1.msra.mxu0 0.0
    %121 = vmatprep.subr.mxu0 0.0
    %122 = vmatpush1.msra.mxu0 0.0
    %123 = vmatprep.subr.mxu0 0.0
    %124 = vmatpush1.msra.mxu0 0.0
    %125 = vmatprep.subr.mxu0 0.0
    %126 = vmatpush1.msra.mxu0 0.0
    %127 = vmatprep.subr.mxu0 0.0
    %128 = vmatpush1.msra.mxu0 0.0
    %129 = vmatprep.subr.mxu0 0.0
    %130 = vmatpush1.msra.mxu0 0.0
    %131 = vmatprep.subr.mxu0 0.0
    %132 = vmatpush1.msra.mxu0 0.0
    %133 = vmatprep.subr.mxu0 0.0
    %134 = vmatpush1.msra.mxu0 0.0
    %135 = vmatprep.subr.mxu0 0.0
    %136 = vmatpush1.msra.mxu0 0.0
    %137 = vmatprep.subr.mxu0 0.0
    %138 = vmatpush1.msra.mxu0 0.0
    %139 = vmatprep.subr.mxu0 0.0
    %140 = vmatpush1.msra.mxu0 0.0
    %141 = vmatprep.subr.mxu0 0.0
    %142 = vmatpush1.msra.mxu0 0.0
    %143 = vmatprep.subr.mxu0 0.0
    %144 = vmatpush1.msra.mxu0 0.0
    %145 = vmatprep.subr.mxu0 0.0
    %146 = vmatpush1.msra.mxu0 0.0
    %147 = vmatprep.subr.mxu0 0.0
    %148 = vmatpush1.msra.mxu0 0.0
    %149 = vmatprep.subr.mxu0 0.0
    %150 = vmatpush1.msra.mxu0 %v114
    %151 = vmatprep.subr.mxu0 0.0
    %152 = vmatpush2.msra.mxu0 0.0
    %153 = vmatprep.subr.mxu0 0.0
    %154 = vmatpush2.msra.mxu0 0.0
    %155 = vmatprep.subr.mxu0 0.0
    %156 = vmatpush2.msra.mxu0 0.0
    %157 = vmatprep.subr.mxu0 0.0
    %158 = vmatpush2.msra.mxu0 0.0
    %159 = vmatprep.subr.mxu0 0.0
    %160 = vmatpush2.msra.mxu0 0.0
    %161 = vmatprep.subr.mxu0 0.0
    %162 = vmatpush2.msra.mxu0 0.0
    %163 = vmatprep.subr.mxu0 0.0
    %164 = vmatpush2.msra.mxu0 0.0
    %165 = vmatprep.subr.mxu0 0.0
    %166 = vmatpush2.msra.mxu0 0.0
    %167 = vmatprep.subr.mxu0 0.0
    %168 = vmatpush2.msra.mxu0 0.0
    %169 = vmatprep.subr.mxu0 0.0
    %170 = vmatpush2.msra.mxu0 0.0
    %171 = vmatprep.subr.mxu0 0.0
    %172 = vmatpush2.msra.mxu0 0.0
    %173 = vmatprep.subr.mxu0 0.0
    %174 = vmatpush2.msra.mxu0 0.0
    %175 = vmatprep.subr.mxu0 0.0
    %176 = vmatpush2.msra.mxu0 0.0
    %177 = vmatprep.subr.mxu0 0.0
    %178 = vmatpush2.msra.mxu0 0.0
    %179 = vmatprep.subr.mxu0 0.0
    %180 = vmatpush2.msra.mxu0 0.0
    %181 = vmatprep.subr.mxu0 0.0
    %182 = vmatpush2.msra.mxu0 0.0
    %183 = vmatprep.mubr.f32.mxu0 0.0
    %184 = vmatmul.mubr.f32.gmra.mxu0 %v117
    %v185 = vpop.f32.mrf.mxu0
    %v186 = vadd.f32 0.0, %v185
    %v187 = vpop.f32.mrf.mxu0
    %188 = vdwg.mxu0
    %vm189 = vcmask 195584
    %v191 = vsel %vm189, %v109, 0
    %193 = vmatprep.subr.mxu0 0.0
    %194 = vmatpush1.msra.mxu0 0.0
    %195 = vmatprep.subr.mxu0 0.0
    %196 = vmatpush1.msra.mxu0 0.0
    %197 = vmatprep.subr.mxu0 0.0
    %198 = vmatpush1.msra.mxu0 0.0
    %199 = vmatprep.subr.mxu0 0.0
    %200 = vmatpush1.msra.mxu0 0.0
    %201 = vmatprep.subr.mxu0 0.0
    %202 = vmatpush1.msra.mxu0 0.0
    %203 = vmatprep.subr.mxu0 0.0
    %204 = vmatpush1.msra.mxu0 0.0
    %205 = vmatprep.subr.mxu0 0.0
    %206 = vmatpush1.msra.mxu0 0.0
    %207 = vmatprep.subr.mxu0 0.0
    %208 = vmatpush1.msra.mxu0 0.0
    %209 = vmatprep.subr.mxu0 0.0
    %210 = vmatpush1.msra.mxu0 0.0
    %211 = vmatprep.subr.mxu0 0.0
    %212 = vmatpush1.msra.mxu0 0.0
    %213 = vmatprep.subr.mxu0 0.0
    %214 = vmatpush1.msra.mxu0 0.0
    %215 = vmatprep.subr.mxu0 0.0
    %216 = vmatpush1.msra.mxu0 0.0
    %217 = vmatprep.subr.mxu0 0.0
    %218 = vmatpush1.msra.mxu0 0.0
    %219 = vmatprep.subr.mxu0 0.0
    %220 = vmatpush1.msra.mxu0 %v112
    %221 = vmatprep.subr.mxu0 0.0
    %222 = vmatpush1.msra.mxu0 %v111
    %223 = vmatprep.subr.mxu0 0.0
    %224 = vmatpush1.msra.mxu0 %v110
    %225 = vmatprep.subr.mxu0 0.0
    %226 = vmatpush2.msra.mxu0 0.0
    %227 = vmatprep.subr.mxu0 0.0
    %228 = vmatpush2.msra.mxu0 0.0
    %229 = vmatprep.subr.mxu0 0.0
    %230 = vmatpush2.msra.mxu0 0.0
    %231 = vmatprep.subr.mxu0 0.0
    %232 = vmatpush2.msra.mxu0 0.0
    %233 = vmatprep.subr.mxu0 0.0
    %234 = vmatpush2.msra.mxu0 0.0
    %235 = vmatprep.subr.mxu0 0.0
    %236 = vmatpush2.msra.mxu0 0.0
    %237 = vmatprep.subr.mxu0 0.0
    %238 = vmatpush2.msra.mxu0 0.0
    %239 = vmatprep.subr.mxu0 0.0
    %240 = vmatpush2.msra.mxu0 0.0
    %241 = vmatprep.subr.mxu0 0.0
    %242 = vmatpush2.msra.mxu0 0.0
    %243 = vmatprep.subr.mxu0 0.0
    %244 = vmatpush2.msra.mxu0 0.0
    %245 = vmatprep.subr.mxu0 0.0
    %246 = vmatpush2.msra.mxu0 0.0
    %247 = vmatprep.subr.mxu0 0.0
    %248 = vmatpush2.msra.mxu0 0.0
    %249 = vmatprep.subr.mxu0 0.0
    %250 = vmatpush2.msra.mxu0 0.0
    %251 = vmatprep.subr.mxu0 0.0
    %252 = vmatpush2.msra.mxu0 0.0
    %253 = vmatprep.subr.mxu0 0.0
    %254 = vmatpush2.msra.mxu0 0.0
    %255 = vmatprep.subr.mxu0 0.0
    %256 = vmatpush2.msra.mxu0 0.0
    %257 = vmatprep.mubr.f32.mxu0 0.0
    %258 = vmatmul.mubr.f32.gmra.mxu0 %v191
    %v259 = vpop.f32.mrf.mxu0
    %v260 = vadd.f32 %v186, %v259
    %v261 = vpop.f32.mrf.mxu0
    %262 = vdwg.mxu0
    %v263 = vld [vmem:[%s4] sm:$0x1]
    %v265 = vlaneseq
    %v266 = vshrl.u32 %v265, 7
    %v267 = vsub.s32 0, %v266
    %v268 = vrot.slane %v263, %v267
    %v270 = vadd.f32 %v260, %v268
    %v271 = vmax.f32 %v270, 0.0
    %v272 = vld [vmem:[#allocation10] sm:$0xff]
    %v273 = vld [vmem:[#allocation10 + $0x8] sm:$0xff]
    %v274 = vld [vmem:[#allocation10 + $0x10] sm:$0xff]
    %v275 = vld [vmem:[#allocation10 + $0x18] sm:$0xff]
    %v276 = vld [vmem:[#allocation10 + $0x20] sm:$0xff]
    %v277 = vld [vmem:[#allocation10 + $0x28] sm:$0xff]
    %v278 = vld [vmem:[#allocation10 + $0x30] sm:$0xff]
    %v279 = vld [vmem:[#allocation10 + $0x38] sm:$0xff]
    %v280 = vld [vmem:[#allocation10 + $0x40] sm:$0xff]
    %v281 = vld [vmem:[#allocation10 + $0x48] sm:$0xff]
    %v282 = vld [vmem:[#allocation10 + $0x50] sm:$0xff]
    %v283 = vld [vmem:[#allocation10 + $0x58] sm:$0xff]
    %v284 = vld [vmem:[#allocation10 + $0x60] sm:$0xff]
    %v285 = vld [vmem:[#allocation10 + $0x68] sm:$0xff]
    %v286 = vld [vmem:[#allocation10 + $0x70] sm:$0xff]
    %v287 = vld [vmem:[#allocation10 + $0x78] sm:$0xff]
    %v288 = vld [vmem:[%s6] sm:$0x1]
    %v290 = vlaneseq
    %v291 = vshrl.u32 %v290, 7
    %v292 = vsub.s32 0, %v291
    %v293 = vrot.slane %v288, %v292
    %295 = vmatprep.subr.mxu0 0.0
    %296 = vmatpush1.msra.mxu0 %v287
    %297 = vmatprep.subr.mxu0 0.0
    %298 = vmatpush1.msra.mxu0 %v286
    %299 = vmatprep.subr.mxu0 0.0
    %300 = vmatpush1.msra.mxu0 %v285
    %301 = vmatprep.subr.mxu0 0.0
    %302 = vmatpush1.msra.mxu0 %v284
    %303 = vmatprep.subr.mxu0 0.0
    %304 = vmatpush1.msra.mxu0 %v283
    %305 = vmatprep.subr.mxu0 0.0
    %306 = vmatpush1.msra.mxu0 %v282
    %307 = vmatprep.subr.mxu0 0.0
    %308 = vmatpush1.msra.mxu0 %v281
    %309 = vmatprep.subr.mxu0 0.0
    %310 = vmatpush1.msra.mxu0 %v280
    %311 = vmatprep.subr.mxu0 0.0
    %312 = vmatpush1.msra.mxu0 %v279
    %313 = vmatprep.subr.mxu0 0.0
    %314 = vmatpush1.msra.mxu0 %v278
    %315 = vmatprep.subr.mxu0 0.0
    %316 = vmatpush1.msra.mxu0 %v277
    %317 = vmatprep.subr.mxu0 0.0
    %318 = vmatpush1.msra.mxu0 %v276
    %319 = vmatprep.subr.mxu0 0.0
    %320 = vmatpush1.msra.mxu0 %v275
    %321 = vmatprep.subr.mxu0 0.0
    %322 = vmatpush1.msra.mxu0 %v274
    %323 = vmatprep.subr.mxu0 0.0
    %324 = vmatpush1.msra.mxu0 %v273
    %325 = vmatprep.subr.mxu0 0.0
    %326 = vmatpush1.msra.mxu0 %v272
    %327 = vmatprep.subr.mxu0 0.0
    %328 = vmatpush2.msra.mxu0 0.0
    %329 = vmatprep.subr.mxu0 0.0
    %330 = vmatpush2.msra.mxu0 0.0
    %331 = vmatprep.subr.mxu0 0.0
    %332 = vmatpush2.msra.mxu0 0.0
    %333 = vmatprep.subr.mxu0 0.0
    %334 = vmatpush2.msra.mxu0 0.0
    %335 = vmatprep.subr.mxu0 0.0
    %336 = vmatpush2.msra.mxu0 0.0
    %337 = vmatprep.subr.mxu0 0.0
    %338 = vmatpush2.msra.mxu0 0.0
    %339 = vmatprep.subr.mxu0 0.0
    %340 = vmatpush2.msra.mxu0 0.0
    %341 = vmatprep.subr.mxu0 0.0
    %342 = vmatpush2.msra.mxu0 0.0
    %343 = vmatprep.subr.mxu0 0.0
    %344 = vmatpush2.msra.mxu0 0.0
    %345 = vmatprep.subr.mxu0 0.0
    %346 = vmatpush2.msra.mxu0 0.0
    %347 = vmatprep.subr.mxu0 0.0
    %348 = vmatpush2.msra.mxu0 0.0
    %349 = vmatprep.subr.mxu0 0.0
    %350 = vmatpush2.msra.mxu0 0.0
    %351 = vmatprep.subr.mxu0 0.0
    %352 = vmatpush2.msra.mxu0 0.0
    %353 = vmatprep.subr.mxu0 0.0
    %354 = vmatpush2.msra.mxu0 0.0
    %355 = vmatprep.subr.mxu0 0.0
    %356 = vmatpush2.msra.mxu0 0.0
    %357 = vmatprep.subr.mxu0 0.0
    %358 = vmatpush2.msra.mxu0 0.0
    %359 = vmatprep.mubr.f32.mxu0 0.0
    %360 = vmatmul.mubr.f32.gmra.mxu0 %v271
    %v361 = vpop.f32.mrf.mxu0
    %v362 = vadd.f32 %v293, %v361
    %v363 = vpop.f32.mrf.mxu0
    %364 = vdwg.mxu0
    %v365 = vmax.f32 %v362, 0.0
    %v366 = vld [vmem:[#allocation11] sm:$0xff]
    %v367 = vld [vmem:[#allocation11 + $0x8] sm:$0xff]
    %v368 = vld [vmem:[#allocation11 + $0x10] sm:$0xff]
    %v369 = vld [vmem:[#allocation11 + $0x18] sm:$0xff]
    %v370 = vld [vmem:[#allocation11 + $0x20] sm:$0xff]
    %v371 = vld [vmem:[#allocation11 + $0x28] sm:$0xff]
    %v372 = vld [vmem:[#allocation11 + $0x30] sm:$0xff]
    %v373 = vld [vmem:[#allocation11 + $0x38] sm:$0xff]
    %v374 = vld [vmem:[#allocation11 + $0x40] sm:$0xff]
    %v375 = vld [vmem:[#allocation11 + $0x48] sm:$0xff]
    %v376 = vld [vmem:[#allocation11 + $0x50] sm:$0xff]
    %v377 = vld [vmem:[#allocation11 + $0x58] sm:$0xff]
    %v378 = vld [vmem:[#allocation11 + $0x60] sm:$0xff]
    %v379 = vld [vmem:[#allocation11 + $0x68] sm:$0xff]
    %v380 = vld [vmem:[#allocation11 + $0x70] sm:$0xff]
    %v381 = vld [vmem:[#allocation11 + $0x78] sm:$0xff]
    %s382 = sld [smem:[#allocation2]]
    %v383 = vstv %s382
    %384 = vmatprep.subr.mxu0 0.0
    %385 = vmatpush1.msra.mxu0 %v381
    %386 = vmatprep.subr.mxu0 0.0
    %387 = vmatpush1.msra.mxu0 %v380
    %388 = vmatprep.subr.mxu0 0.0
    %389 = vmatpush1.msra.mxu0 %v379
    %390 = vmatprep.subr.mxu0 0.0
    %391 = vmatpush1.msra.mxu0 %v378
    %392 = vmatprep.subr.mxu0 0.0
    %393 = vmatpush1.msra.mxu0 %v377
    %394 = vmatprep.subr.mxu0 0.0
    %395 = vmatpush1.msra.mxu0 %v376
    %396 = vmatprep.subr.mxu0 0.0
    %397 = vmatpush1.msra.mxu0 %v375
    %398 = vmatprep.subr.mxu0 0.0
    %399 = vmatpush1.msra.mxu0 %v374
    %400 = vmatprep.subr.mxu0 0.0
    %401 = vmatpush1.msra.mxu0 %v373
    %402 = vmatprep.subr.mxu0 0.0
    %403 = vmatpush1.msra.mxu0 %v372
    %404 = vmatprep.subr.mxu0 0.0
    %405 = vmatpush1.msra.mxu0 %v371
    %406 = vmatprep.subr.mxu0 0.0
    %407 = vmatpush1.msra.mxu0 %v370
    %408 = vmatprep.subr.mxu0 0.0
    %409 = vmatpush1.msra.mxu0 %v369
    %410 = vmatprep.subr.mxu0 0.0
    %411 = vmatpush1.msra.mxu0 %v368
    %412 = vmatprep.subr.mxu0 0.0
    %413 = vmatpush1.msra.mxu0 %v367
    %414 = vmatprep.subr.mxu0 0.0
    %415 = vmatpush1.msra.mxu0 %v366
    %416 = vmatprep.subr.mxu0 0.0
    %417 = vmatpush2.msra.mxu0 0.0
    %418 = vmatprep.subr.mxu0 0.0
    %419 = vmatpush2.msra.mxu0 0.0
    %420 = vmatprep.subr.mxu0 0.0
    %421 = vmatpush2.msra.mxu0 0.0
    %422 = vmatprep.subr.mxu0 0.0
    %423 = vmatpush2.msra.mxu0 0.0
    %424 = vmatprep.subr.mxu0 0.0
    %425 = vmatpush2.msra.mxu0 0.0
    %426 = vmatprep.subr.mxu0 0.0
    %427 = vmatpush2.msra.mxu0 0.0
    %428 = vmatprep.subr.mxu0 0.0
    %429 = vmatpush2.msra.mxu0 0.0
    %430 = vmatprep.subr.mxu0 0.0
    %431 = vmatpush2.msra.mxu0 0.0
    %432 = vmatprep.subr.mxu0 0.0
    %433 = vmatpush2.msra.mxu0 0.0
    %434 = vmatprep.subr.mxu0 0.0
    %435 = vmatpush2.msra.mxu0 0.0
    %436 = vmatprep.subr.mxu0 0.0
    %437 = vmatpush2.msra.mxu0 0.0
    %438 = vmatprep.subr.mxu0 0.0
    %439 = vmatpush2.msra.mxu0 0.0
    %440 = vmatprep.subr.mxu0 0.0
    %441 = vmatpush2.msra.mxu0 0.0
    %442 = vmatprep.subr.mxu0 0.0
    %443 = vmatpush2.msra.mxu0 0.0
    %444 = vmatprep.subr.mxu0 0.0
    %445 = vmatpush2.msra.mxu0 0.0
    %446 = vmatprep.subr.mxu0 0.0
    %447 = vmatpush2.msra.mxu0 0.0
    %448 = vmatprep.mubr.f32.mxu0 0.0
    %449 = vmatmul.mubr.f32.gmra.mxu0 %v365
    %v450 = vpop.f32.mrf.mxu0
    %v451 = vadd.f32 %v383, %v450
    %v452 = vpop.f32.mrf.mxu0
    %453 = vdwg.mxu0
    %vm454 = vcmask 7168
    %455 = vst.msk [vmem:[%s9] sm:$0xff] %vm454, %v451
    // Predicated region
    $region62: #{tpu_custom_call.1} parent=1 // pred_check
      _
    $region63: #{tpu_custom_call.1} parent=1 // pred_check_branch
      %457 = sbr.rel (0) target = $region65
    $region64: #{tpu_custom_call.1} parent=1 // pred_region
      _
    $region65: #{tpu_custom_call.1} parent=1 // pred_fallthru
      _
    // Predicated region
    $region66: #{tpu_custom_call.1} parent=1 // pred_check
      _
    $region67: #{tpu_custom_call.1} parent=1 // pred_check_branch
      %459 = sbr.rel (0) target = $region69
    $region68: #{tpu_custom_call.1} parent=1 // pred_region
      _
    $region69: #{tpu_custom_call.1} parent=1 // pred_fallthru
      _
    %460 = vsyncpa [#allocation4], 1
    %461 = vsyncpa [#allocation6], 1
    %462 = vsyncpa [#allocation9], 1
    %463 = vsyncpa [#allocation12], 1

</llo_original>
